<compile_context>
chip_gen: v7x
topology: tpu7x:2x2x1
jax: 0.10.0
libtpu: 0.0.40
codegen_flags: <defaults>
</compile_context>

<pallas_src>
import functools

import jax
import jax.numpy as jnp
from jax.experimental import pallas as pl
from jax.experimental.pallas import tpu as pltpu


# ---------------------------------------------------------------------------
# Kernels
# ---------------------------------------------------------------------------

def _conv_bn_relu_kernel(p_ref, w_ref, b_ref, o_ref):
    """Small-K path: one MXU dot per grid step, accumulation held in vregs.

    p_ref: (K, T)      im2col patches (lane dim = spatial tile, %128)
    w_ref: (Cout, K)   conv weight with BN scale folded in
    b_ref: (Cout, 1)   folded BN bias (f32)
    o_ref: (Cout, T)   lane-dense output tile (written once)
    """
    acc = jnp.dot(w_ref[...], p_ref[...], preferred_element_type=jnp.float32)
    o_ref[...] = jnp.maximum(acc + b_ref[...], 0.0).astype(o_ref.dtype)


def _conv_bn_relu_kernel_ktiled(p_ref, w_ref, b_ref, o_ref, acc_ref):
    """Large-K path: K is the trailing "arbitrary" grid axis.

    Accumulate partial products in an f32 VMEM scratch; apply BN bias + ReLU
    and store only on the last K step.
    """
    kk = pl.program_id(2)

    @pl.when(kk == 0)
    def _():
        acc_ref[...] = jnp.zeros_like(acc_ref)

    acc_ref[...] += jnp.dot(w_ref[...], p_ref[...],
                            preferred_element_type=jnp.float32)

    @pl.when(kk == pl.num_programs(2) - 1)
    def _():
        o_ref[...] = jnp.maximum(acc_ref[...] + b_ref[...],
                                 0.0).astype(o_ref.dtype)


# ---------------------------------------------------------------------------
# Planning helpers (all static / trace-time Python ints)
# ---------------------------------------------------------------------------

def _round_up(x, m):
    return ((x + m - 1) // m) * m


def _vmem_capacity_bytes():
    try:
        return int(pltpu.get_tpu_info().vmem_capacity_bytes)
    except Exception:
        # Conservative fallback = v7x per-TensorCore physical VMEM.
        return 64 * 1024 * 1024


_VMEM_BYTES = _vmem_capacity_bytes()


def _est_vmem_bytes(cout, k_blk, tile, in_bytes, out_bytes, *, ktiled,
                    w_single_buf):
    """Rough per-call VMEM footprint for the chosen blocks (double-buffered)."""
    patches = 2 * k_blk * tile * in_bytes                      # input tile
    weight = (1 if w_single_buf else 2) * cout * k_blk * in_bytes
    bias = 2 * _round_up(cout, 8) * 128 * 4                    # lane-padded
    out = 2 * cout * tile * out_bytes                          # output tile
    acc = cout * tile * 4 if ktiled else 0                     # f32 scratch
    return patches + weight + bias + out + acc


def _plan_tiles(n_batch, cout, k, hw, in_bytes, out_bytes, budget):
    """Pick (spatial_tile, k_tile_or_None) so all blocks fit `budget` VMEM.

    Spatial tiles are multiples of 128 (lane-dense, unmasked stores); the
    wrapper pads the flattened Ho*Wo axis up to a multiple of the chosen tile,
    so hw does not need to be divisible by anything.  When batch == 1 we force
    >= 2 spatial tiles so both v7x TensorCores get work.  We prefer the biggest
    spatial tile and only then start tiling K ("arbitrary" axis) — K tiling is
    what keeps large-channel layers under the VMEM budget.
    """
    hw128 = _round_up(hw, 128)
    cand = [min(hw128, 1024)] + [t for t in (1024, 768, 512, 384, 256, 128)
                                 if t < hw128]
    tiles = list(dict.fromkeys(cand))
    if n_batch == 1 and hw128 >= 256:
        tiles = [t for t in tiles if -(-hw // t) >= 2] or [128]

    k_opts = [None] + [tk for tk in (1024, 512, 256, 128) if tk < k]
    for tile in tiles:
        for tk in k_opts:
            k_blk = k if tk is None else tk
            est = _est_vmem_bytes(cout, k_blk, tile, in_bytes, out_bytes,
                                  ktiled=tk is not None, w_single_buf=False)
            if est <= budget:
                return tile, tk
    return 128, 128


# ---------------------------------------------------------------------------
# Forward pass
# ---------------------------------------------------------------------------

@functools.partial(
    jax.jit,
    static_argnames=("stride", "padding", "eps", "compute_dtype", "out_dtype",
                     "k_block"))
def basic_conv(x_nchw, weight_oihw, gamma, beta, running_mean, running_var,
               *, stride=1, padding=1, eps=1e-5, compute_dtype=jnp.bfloat16,
               out_dtype=None, k_block=None):
    """BasicConv forward: conv2d(bias=False) + batchnorm2d(eval) + relu.

    x_nchw:      (N, Cin, H, W)     — PyTorch layout in and out
    weight_oihw: (Cout, Cin, KH, KW)
    out_dtype:   output dtype (default = x dtype); pass jnp.bfloat16 to halve
                 the output HBM writeback if downstream accepts it.
    k_block:     optional override of the contraction tile (multiple of 128).
    returns:     (N, Cout, Ho, Wo)
    """
    n, cin, h, w = x_nchw.shape
    cout, _, kh, kw = weight_oihw.shape
    sh = sw = stride
    ho = (h + 2 * padding - kh) // sh + 1
    wo = (w + 2 * padding - kw) // sw + 1
    hw = ho * wo
    k = kh * kw * cin
    out_dtype = x_nchw.dtype if out_dtype is None else out_dtype

    # ---- glue (plain JAX): BN eval-mode folding, bf16 cast, im2col ----
    inv = (gamma / jnp.sqrt(running_var + eps)).astype(jnp.float32)
    w_fold = weight_oihw.astype(jnp.float32) * inv[:, None, None, None]
    # (Cout, KH, KW, Cin) -> (Cout, K); K ordering (kh, kw, cin) matches the
    # tap concatenation below.
    w_flat = jnp.transpose(w_fold, (0, 2, 3, 1)).reshape(cout, k)
    w_flat = w_flat.astype(compute_dtype)
    bias_col = (beta - running_mean * inv).reshape(cout, 1).astype(jnp.float32)

    x_p = jnp.pad(x_nchw.astype(compute_dtype),
                  ((0, 0), (0, 0), (padding, padding), (padding, padding)))
    taps = [x_p[:, :, i:i + sh * (ho - 1) + 1:sh, j:j + sw * (wo - 1) + 1:sw]
            for i in range(kh) for j in range(kw)]
    # Concatenate along channels -> (N, K, Ho, Wo) directly (no 5-D stack),
    # then merge spatial dims onto the lane axis: (N, K, Ho*Wo).
    patches = jnp.concatenate(taps, axis=1).reshape(n, k, hw)

    # ---- VMEM-aware tiling plan ----
    in_bytes = jnp.dtype(compute_dtype).itemsize
    out_bytes = jnp.dtype(out_dtype).itemsize
    budget = int(0.45 * _VMEM_BYTES)          # headroom for pipeliner/internal
    tile, tk = _plan_tiles(n, cout, k, hw, in_bytes, out_bytes, budget)
    if k_block is not None:
        tk = k_block

    hw_pad = _round_up(hw, tile)
    k_pad = k if tk is None else _round_up(k, tk)
    if hw_pad != hw or k_pad != k:
        patches = jnp.pad(patches, ((0, 0), (0, k_pad - k), (0, hw_pad - hw)))
    if k_pad != k:
        w_flat = jnp.pad(w_flat, ((0, 0), (0, k_pad - k)))
    num_tiles = hw_pad // tile

    w_bytes = cout * k_pad * in_bytes
    k_blk = k_pad if tk is None else tk
    est = _est_vmem_bytes(cout, k_blk, tile, in_bytes, out_bytes,
                          ktiled=tk is not None, w_single_buf=False)
    vmem_limit = min(int(0.9 * _VMEM_BYTES),
                     max(2 * est + (8 << 20), 32 << 20))

    cost = pl.CostEstimate(
        flops=2 * n * cout * k_pad * hw_pad,
        transcendentals=0,
        bytes_accessed=(n * k_pad * hw_pad * in_bytes + w_bytes
                        + n * cout * hw_pad * out_bytes + cout * 4))

    if tk is None:
        # Small-K path: full contraction in one dot, no scratch accumulator.
        # Weight/bias index maps are grid-invariant; single-buffer the weight
        # only when it is big enough for the VMEM saving to matter.
        w_pipeline = pl.Buffered(1) if w_bytes >= (1 << 20) else None
        grid = (n, num_tiles)
        in_specs = [
            pl.BlockSpec((pl.Squeezed(), k_pad, tile), lambda b, t: (b, 0, t)),
            pl.BlockSpec((cout, k_pad), lambda b, t: (0, 0),
                         pipeline_mode=w_pipeline),
            pl.BlockSpec((cout, 1), lambda b, t: (0, 0)),
        ]
        out_spec = pl.BlockSpec((pl.Squeezed(), cout, tile),
                                lambda b, t: (b, 0, t))
        kernel = _conv_bn_relu_kernel
        scratch = []
        semantics = ("parallel", "parallel")
    else:
        # Large-K path: trailing "arbitrary" K axis + f32 VMEM accumulator.
        num_k = k_pad // tk
        grid = (n, num_tiles, num_k)
        in_specs = [
            pl.BlockSpec((pl.Squeezed(), tk, tile),
                         lambda b, t, kk: (b, kk, t)),
            pl.BlockSpec((cout, tk), lambda b, t, kk: (0, kk)),
            pl.BlockSpec((cout, 1), lambda b, t, kk: (0, 0)),
        ]
        out_spec = pl.BlockSpec((pl.Squeezed(), cout, tile),
                                lambda b, t, kk: (b, 0, t))
        kernel = _conv_bn_relu_kernel_ktiled
        scratch = [pltpu.VMEM((cout, tile), jnp.float32)]
        semantics = ("parallel", "parallel", "arbitrary")

    out_flat = pl.pallas_call(
        kernel,
        out_shape=jax.ShapeDtypeStruct((n, cout, hw_pad), out_dtype),
        grid=grid,
        in_specs=in_specs,
        out_specs=out_spec,
        scratch_shapes=scratch,
        compiler_params=pltpu.CompilerParams(
            dimension_semantics=semantics,
            vmem_limit_bytes=vmem_limit),
        cost_estimate=cost,
    )(patches, w_flat, bias_col)

    # Already NCHW-ordered: drop the lane padding, restore spatial dims.
    return out_flat[:, :, :hw].reshape(n, cout, ho, wo)


# ---------------------------------------------------------------------------
# Reference & self-test
# ---------------------------------------------------------------------------

def _reference(x_nchw, weight_oihw, gamma, beta, running_mean, running_var,
               *, stride=1, padding=1, eps=1e-5, compute_dtype=jnp.float32):
    """Plain-JAX reference of the same forward pass (same BN folding)."""
    inv = gamma / jnp.sqrt(running_var + eps)
    w_fold = weight_oihw * inv[:, None, None, None]
    bias = (beta - running_mean * inv).reshape(1, -1, 1, 1)
    y = jax.lax.conv_general_dilated(
        x_nchw.astype(compute_dtype), w_fold.astype(compute_dtype),
        window_strides=(stride, stride),
        padding=[(padding, padding), (padding, padding)],
        dimension_numbers=("NCHW", "OIHW", "NCHW"),
        preferred_element_type=jnp.float32)
    return jnp.maximum(y + bias, 0.0).astype(jnp.float32)


if __name__ == "__main__":
    key = jax.random.PRNGKey(0)
    kx, kw_, kg, kb, kx2, kw2 = jax.random.split(key, 6)

    # ---- Run 1: small shapes (BasicConv(4, 8, kernel_size=3, padding=1)),
    #             small-K single-dot path, f32 output. ----
    N, CIN, H, W = 2, 4, 16, 16
    COUT, KH, KW = 8, 3, 3

    x = jax.random.normal(kx, (N, CIN, H, W), dtype=jnp.float32)
    weight = jax.random.normal(kw_, (COUT, CIN, KH, KW), dtype=jnp.float32) * 0.1
    gamma = 1.0 + 0.05 * jax.random.normal(kg, (COUT,), dtype=jnp.float32)
    beta = 0.05 * jax.random.normal(kb, (COUT,), dtype=jnp.float32)
    running_mean = jnp.zeros((COUT,), jnp.float32)
    running_var = jnp.ones((COUT,), jnp.float32)

    out = basic_conv(x, weight, gamma, beta, running_mean, running_var,
                     stride=1, padding=1)
    out = jax.block_until_ready(out)
    assert out.shape == (N, COUT, H, W), out.shape

    ref_bf16 = _reference(x, weight, gamma, beta, running_mean, running_var,
                          stride=1, padding=1, compute_dtype=jnp.bfloat16)
    assert jnp.allclose(out, ref_bf16, atol=1e-3, rtol=1e-3), float(
        jnp.max(jnp.abs(out - ref_bf16)))

    ref_f32 = _reference(x, weight, gamma, beta, running_mean, running_var,
                         stride=1, padding=1, compute_dtype=jnp.float32)
    assert jnp.allclose(out, ref_f32, atol=5e-2, rtol=5e-2), float(
        jnp.max(jnp.abs(out - ref_f32)))

    # ---- Run 2: exercise the K-tiled accumulator path (forced k_block=128)
    #             with a bf16 output (reduced store traffic). ----
    CIN2 = 16   # K = 144 -> padded to 256, two K steps of 128
    x2 = jax.random.normal(kx2, (N, CIN2, H, W), dtype=jnp.float32)
    weight2 = jax.random.normal(kw2, (COUT, CIN2, KH, KW),
                                dtype=jnp.float32) * 0.1

    out2 = basic_conv(x2, weight2, gamma, beta, running_mean, running_var,
                      stride=1, padding=1, out_dtype=jnp.bfloat16, k_block=128)
    out2 = jax.block_until_ready(out2)
    assert out2.shape == (N, COUT, H, W), out2.shape
    assert out2.dtype == jnp.bfloat16, out2.dtype

    ref2 = _reference(x2, weight2, gamma, beta, running_mean, running_var,
                      stride=1, padding=1, compute_dtype=jnp.float32)
    assert jnp.allclose(out2.astype(jnp.float32), ref2,
                        atol=7.5e-2, rtol=7.5e-2), float(
        jnp.max(jnp.abs(out2.astype(jnp.float32) - ref2)))

    print("KERNEL_OK")
</pallas_src>

<mosaic_0001>
module attributes {stable_mosaic.version = 11 : i64} {
  func.func @_conv_bn_relu_kernel(%arg0: i32, %arg1: i32, %arg2: memref<1x36x256xbf16, #tpu.memory_space<vmem>>, %arg3: memref<8x36xbf16, #tpu.memory_space<vmem>>, %arg4: memref<8x1xf32, #tpu.memory_space<vmem>>, %arg5: memref<1x8x256xf32, #tpu.memory_space<vmem>>) attributes {dimension_semantics = [#tpu.dimension_semantics<parallel>, #tpu.dimension_semantics<parallel>], iteration_bounds = array<i64: 2, 1>, scalar_prefetch = 0 : i64, scratch_operands = 0 : i64, tpu.core_type = #tpu.core_type<tc>, window_params = [{transform_indices = @transform_0, window_bounds = array<i64: 1, 36, 256>}, {pipeline_mode = #tpu.pipeline_mode<synchronous>, transform_indices = @transform_1, window_bounds = array<i64: 8, 36>}, {pipeline_mode = #tpu.pipeline_mode<synchronous>, transform_indices = @transform_2, window_bounds = array<i64: 8, 1>}, {transform_indices = @transform_3, window_bounds = array<i64: 1, 8, 256>}]} {
    %c0 = arith.constant 0 : index
    %c0_0 = arith.constant 0 : index
    %0 = vector.load %arg3[%c0, %c0_0] : memref<8x36xbf16, #tpu.memory_space<vmem>>, vector<8x36xbf16>
    %c0_1 = arith.constant 0 : index
    %c0_2 = arith.constant 0 : index
    %c0_3 = arith.constant 0 : index
    %1 = vector.load %arg2[%c0_1, %c0_2, %c0_3] : memref<1x36x256xbf16, #tpu.memory_space<vmem>>, vector<1x36x256xbf16>
    %2 = vector.shape_cast %1 : vector<1x36x256xbf16> to vector<36x256xbf16>
    %cst = arith.constant dense<0.000000e+00> : vector<8x256xf32>
    %3 = tpu.matmul %0, %2, %cst {dimension_numbers = #tpu.dot_dimension_numbers<[1], [0], [0], [1], [0, 0, 1, 1], [], []>} : vector<8x36xbf16>, vector<36x256xbf16>, vector<8x256xf32> -> vector<8x256xf32>
    %c0_4 = arith.constant 0 : index
    %c0_5 = arith.constant 0 : index
    %4 = vector.load %arg4[%c0_4, %c0_5] : memref<8x1xf32, #tpu.memory_space<vmem>>, vector<8x1xf32>
    %5 = vector.broadcast %4 : vector<8x1xf32> to vector<8x256xf32>
    %6 = arith.addf %3, %5 : vector<8x256xf32>
    %cst_6 = arith.constant 0.000000e+00 : f32
    %7 = vector.broadcast %cst_6 : f32 to vector<8x256xf32>
    %8 = arith.maximumf %6, %7 : vector<8x256xf32>
    %c0_7 = arith.constant 0 : index
    %c0_8 = arith.constant 0 : index
    %c0_9 = arith.constant 0 : index
    %9 = vector.load %arg5[%c0_7, %c0_8, %c0_9] : memref<1x8x256xf32, #tpu.memory_space<vmem>>, vector<1x8x256xf32>
    %10 = vector.shape_cast %9 : vector<1x8x256xf32> to vector<8x256xf32>
    %11 = vector.shape_cast %8 : vector<8x256xf32> to vector<1x8x256xf32>
    tpu.vector_store %arg5[%c0_7, %c0_8, %c0_9], %11 {strides = array<i32>} : memref<1x8x256xf32, #tpu.memory_space<vmem>>, vector<1x8x256xf32>,
    return
  }
  func.func @transform_0(%arg0: i32, %arg1: i32) -> (i32, i32, i32) {
    %c0_i32 = arith.constant 0 : i32
    %c0_i32_0 = arith.constant 0 : i32
    return %arg0, %c0_i32, %arg1 : i32, i32, i32
  }
  func.func @transform_1(%arg0: i32, %arg1: i32) -> (i32, i32) {
    %c0_i32 = arith.constant 0 : i32
    %c0_i32_0 = arith.constant 0 : i32
    %c0_i32_1 = arith.constant 0 : i32
    return %c0_i32, %c0_i32_0 : i32, i32
  }
  func.func @transform_2(%arg0: i32, %arg1: i32) -> (i32, i32) {
    %c0_i32 = arith.constant 0 : i32
    %c0_i32_0 = arith.constant 0 : i32
    %c0_i32_1 = arith.constant 0 : i32
    return %c0_i32, %c0_i32_0 : i32, i32
  }
  func.func @transform_3(%arg0: i32, %arg1: i32) -> (i32, i32, i32) {
    %c0_i32 = arith.constant 0 : i32
    %c0_i32_0 = arith.constant 0 : i32
    return %arg0, %c0_i32, %arg1 : i32, i32, i32
  }
}

</mosaic_0001>

<llo_original>
// kernel: basic_conv.1
$region0: #{basic_conv.1}
  #allocation0 [shape = 'u32[]', space=smem, size = 0x4, offset = 0x4, fixed_abs, tag = 'smem constant byte address 0x4 - core index']
  #allocation1 [shape = 'u32[144,128]{1,0:T(1,128)}', space=vmem, size = 0x12000, scoped, tag = 'internal scratch']
  %s0 = inlined_call_operand.vmem [shape: bf16[2,36,256], index: 0, kind: input, shape index: {}]
  %s1 = inlined_call_operand.vmem [shape: bf16[8,36], index: 1, kind: input, shape index: {}]
  %s2 = inlined_call_operand.vmem [shape: f32[8,1], index: 2, kind: input, shape index: {}]
  %s3 = inlined_call_operand.vmem [shape: f32[2,8,256], index: 3, kind: output, shape index: {}]
  %s4 = sld [smem:[#allocation0]]
  $region45: #{basic_conv.1} parent=0
    _
  %s6 = ssub.s32 1, %s4
  %s7 = scalar_select 0, %s6, %s4
  loop: start=0, step=1, limit=4
  $region2: #{basic_conv.1} parent=0 // loop_pre_header
    _
  $region3: #{basic_conv.1} parent=0 // loop_header
    %s9 = sphi 0, %s13
    %p10 = scmp.ge.s32.totalorder %s9, 4
    %s16 = sphi 0, %s28
    %s17 = sphi 0, %s24
    %s18 = sphi 0, %s16
    %s19 = sphi 0, %s17
    %s20 = sphi 0, %s18
    %s21 = sphi 0, %s19
    %s33 = sphi 0, %s35
    %s36 = sphi 0, %s33
    %s37 = sphi 0, %s36
    %s53 = sphi 0, %s37
    %s57 = sphi 0, %s57
    %s59 = sphi 0, %s57
    %s60 = sphi 0, %s59
    %s74 = sphi 0, %s60
    %s78 = sphi 0, %s78
    %s80 = sphi 0, %s78
    %s81 = sphi 0, %s80
    %s95 = sphi 0, %s81
    %s103 = sphi 0, %s105
    %s106 = sphi 0, %s103
    %s107 = sphi 0, %s106
    %s123 = sphi 0, %s107
  $region4: #{basic_conv.1} parent=0 // loop_header_branch
    %12 = sbr.rel (%p10) target = $region8
  $region5: #{basic_conv.1} parent=0 // loop_body
    %s14 = ssub.s32 %s9, 1
    %s15 = ssub.s32 %s9, 2
    %s22 = sadd.s32 1, %s17
    %p23 = scmp.ge.s32.totalorder %s22, 1
    %s24 = scalar_select %p23, 0, %s22
    %s25 = sadd.s32 1, %s16
    %s26 = scalar_select %p23, %s25, %s16
    %p27 = scmp.ge.s32.totalorder %s26, 2
    %s28 = scalar_select %p27, 0, %s26
    %s29 = ssub.s32 %s16, %s28
    %s30 = ssub.s32 %s17, %s24
    %s31 = sor.u32 %s29, %s30
    %p32 = scmp.eq.s32.totalorder %s31, 0
    %s34 = sadd.s32 %s33, 1
    %s35 = scalar_select %p32, %s33, %s34
    %p38 = pneg %p32
    %p39 = scmp.eq.s32.totalorder %s9, 1
    %p40 = por %p38, %p39
    %p41 = scmp.ne.s32.totalorder %s33, %s36
    %p42 = scmp.eq.s32.totalorder %s9, 0
    %p43 = por %p41, %p42
    %p44 = scmp.ne.s32.totalorder %s33, %s36
    %p45 = scmp.eq.s32.totalorder %s14, 1
    %p46 = por %p44, %p45
    %p47 = scmp.ne.s32.totalorder %s36, %s37
    %p48 = scmp.eq.s32.totalorder %s14, 0
    %p49 = por %p47, %p48
    %p50 = scmp.ne.s32.totalorder %s36, %s37
    %p51 = scmp.eq.s32.totalorder %s15, 1
    %p52 = por %p50, %p51
    %p54 = scmp.ne.s32.totalorder %s37, %s53
    %p55 = scmp.eq.s32.totalorder %s15, 0
    %p56 = por %p54, %p55
    %s58 = sadd.s32 %s57, 1
    %p61 = scmp.eq.s32.totalorder %s9, 1
    %p62 = scmp.ne.s32.totalorder %s57, %s59
    %p63 = scmp.eq.s32.totalorder %s9, 0
    %p64 = por %p62, %p63
    %p65 = scmp.ne.s32.totalorder %s57, %s59
    %p66 = scmp.eq.s32.totalorder %s14, 1
    %p67 = por %p65, %p66
    %p68 = scmp.ne.s32.totalorder %s59, %s60
    %p69 = scmp.eq.s32.totalorder %s14, 0
    %p70 = por %p68, %p69
    %p71 = scmp.ne.s32.totalorder %s59, %s60
    %p72 = scmp.eq.s32.totalorder %s15, 1
    %p73 = por %p71, %p72
    %p75 = scmp.ne.s32.totalorder %s60, %s74
    %p76 = scmp.eq.s32.totalorder %s15, 0
    %p77 = por %p75, %p76
    %s79 = sadd.s32 %s78, 1
    %p82 = scmp.eq.s32.totalorder %s9, 1
    %p83 = scmp.ne.s32.totalorder %s78, %s80
    %p84 = scmp.eq.s32.totalorder %s9, 0
    %p85 = por %p83, %p84
    %p86 = scmp.ne.s32.totalorder %s78, %s80
    %p87 = scmp.eq.s32.totalorder %s14, 1
    %p88 = por %p86, %p87
    %p89 = scmp.ne.s32.totalorder %s80, %s81
    %p90 = scmp.eq.s32.totalorder %s14, 0
    %p91 = por %p89, %p90
    %p92 = scmp.ne.s32.totalorder %s80, %s81
    %p93 = scmp.eq.s32.totalorder %s15, 1
    %p94 = por %p92, %p93
    %p96 = scmp.ne.s32.totalorder %s81, %s95
    %p97 = scmp.eq.s32.totalorder %s15, 0
    %p98 = por %p96, %p97
    %s99 = ssub.s32 %s16, %s28
    %s100 = ssub.s32 %s17, %s24
    %s101 = sor.u32 %s99, %s100
    %p102 = scmp.eq.s32.totalorder %s101, 0
    %s104 = sadd.s32 %s103, 1
    %s105 = scalar_select %p102, %s103, %s104
    %p108 = pneg %p102
    %p109 = scmp.eq.s32.totalorder %s9, 1
    %p110 = por %p108, %p109
    %p111 = scmp.ne.s32.totalorder %s103, %s106
    %p112 = scmp.eq.s32.totalorder %s9, 0
    %p113 = por %p111, %p112
    %p114 = scmp.ne.s32.totalorder %s103, %s106
    %p115 = scmp.eq.s32.totalorder %s14, 1
    %p116 = por %p114, %p115
    %p117 = scmp.ne.s32.totalorder %s106, %s107
    %p118 = scmp.eq.s32.totalorder %s14, 0
    %p119 = por %p117, %p118
    %p120 = scmp.ne.s32.totalorder %s106, %s107
    %p121 = scmp.eq.s32.totalorder %s15, 1
    %p122 = por %p120, %p121
    %p124 = scmp.ne.s32.totalorder %s107, %s123
    %p125 = scmp.eq.s32.totalorder %s15, 0
    %p126 = por %p124, %p125
    %p127 = scmp.le.s32.totalorder 1, %s9
    %p128 = scmp.lt.s32.totalorder %s9, 3
    %p129 = pnand %p127, %p128
    %p130 = pneg %p129
    // Predicated region
    $region9: #{basic_conv.1} parent=5 // pred_check
      _
    $region10: #{basic_conv.1} parent=5 // pred_check_branch
      %132 = sbr.rel (%p129) target = $region12
    $region11: #{basic_conv.1} parent=5 // pred_region
      %s133 = ssub.s32 %s9, 1
      // Predicated region
      $region13: #{basic_conv.1} parent=11 // pred_check
        %p134 = pneg %p70
      $region14: #{basic_conv.1} parent=11 // pred_check_branch
        %136 = sbr.rel (%p134) target = $region16
      $region15: #{basic_conv.1} parent=11 // pred_region
        _
      $region16: #{basic_conv.1} parent=11 // pred_fallthru
        _
      // Predicated region
      $region17: #{basic_conv.1} parent=11 // pred_check
        %p137 = pneg %p91
      $region18: #{basic_conv.1} parent=11 // pred_check_branch
        %139 = sbr.rel (%p137) target = $region20
      $region19: #{basic_conv.1} parent=11 // pred_region
        _
      $region20: #{basic_conv.1} parent=11 // pred_fallthru
        _
    $region12: #{basic_conv.1} parent=5 // pred_fallthru
      _
    %p140 = scmp.lt.s32.totalorder %s9, 2
    // Predicated region
    $region21: #{basic_conv.1} parent=5 // pred_check
      %p141 = pneg %p140
    $region22: #{basic_conv.1} parent=5 // pred_check_branch
      %143 = sbr.rel (%p141) target = $region24
    $region23: #{basic_conv.1} parent=5 // pred_region
      // Predicated region
      $region25: #{basic_conv.1} parent=23 // pred_check
        %p144 = pneg %p43
      $region26: #{basic_conv.1} parent=23 // pred_check_branch
        %146 = sbr.rel (%p144) target = $region28
      $region27: #{basic_conv.1} parent=23 // pred_region
        %s147 = smul.u32 2, %s17
        %p148 = scmp.lt.s32.totalorder %s16, 1
        %s149 = scalar_select %p148, %s16, 1
        %p150 = scmp.lt.s32.totalorder %s147, 1
        %s151 = scalar_select %p150, %s147, 1
        %s152 = smul.addr %s149, 10
        %s153 = sadd.s32 %s151, %s152
        %s154 = smul.addr %s153, 4
        %s155 = scalar_lea.vmem %s0, %s154
        %s156 = smul.u32 2, %s17
      $region28: #{basic_conv.1} parent=23 // pred_fallthru
        _
    $region24: #{basic_conv.1} parent=5 // pred_fallthru
      _
    %p157 = scmp.le.s32.totalorder 1, %s9
    %p158 = scmp.lt.s32.totalorder %s9, 3
    %p159 = pnand %p157, %p158
    %p160 = pneg %p159
    // Predicated region
    $region29: #{basic_conv.1} parent=5 // pred_check
      _
    $region30: #{basic_conv.1} parent=5 // pred_check_branch
      %162 = sbr.rel (%p159) target = $region32
    $region31: #{basic_conv.1} parent=5 // pred_region
      %s163 = ssub.s32 %s9, 1
      %s164 = smul.u32 2, %s19
      %p165 = scmp.lt.s32.totalorder %s18, 1
      %s166 = scalar_select %p165, %s18, 1
      %p167 = scmp.lt.s32.totalorder %s164, 1
      %s168 = scalar_select %p167, %s164, 1
      %s169 = smul.addr %s166, 10
      %s170 = sadd.s32 %s168, %s169
      %s171 = smul.addr %s170, 4
      %s172 = scalar_lea.vmem %s0, %s171
      %p173 = pneg %p49
      %p174 = pneg %p46
      %p175 = pneg %p70
      %p176 = pneg %p67
      %p177 = pneg %p91
      %p178 = pneg %p88
      %p179 = pneg %p119
      %p180 = pneg %p116
      %s181 = smul.u32 2, %s19
      %p182 = scmp.lt.s32.totalorder %s18, 1
      %s183 = scalar_select %p182, %s18, 1
      %p184 = scmp.lt.s32.totalorder %s181, 1
      %s185 = scalar_select %p184, %s181, 1
      %s186 = smul.addr %s183, 2
      %s187 = sadd.s32 %s185, %s186
      %s188 = smul.addr %s187, 8
      %s189 = scalar_lea.vmem %s3, %s188
      %s190 = smul.u32 2, %s19
      %p191 = scmp.lt.s32.totalorder %s18, 1
      %s192 = scalar_select %p191, %s18, 1
      %p193 = scmp.lt.s32.totalorder %s190, 1
      %s194 = scalar_select %p193, %s190, 1
      %s195 = smul.addr %s192, 10
      %s196 = sadd.s32 %s194, %s195
      %s197 = smul.addr %s196, 4
      %s198 = scalar_lea.vmem %s0, %s197
      %s199 = smul.u32 2, %s19
      %s200 = smul.u32 2, %s19
      %p201 = scmp.lt.s32.totalorder %s18, 1
      %s202 = scalar_select %p201, %s18, 1
      %p203 = scmp.lt.s32.totalorder %s200, 1
      %s204 = scalar_select %p203, %s200, 1
      %s205 = smul.addr %s202, 2
      %s206 = sadd.s32 %s204, %s205
      %s207 = smul.addr %s206, 8
      %s208 = scalar_lea.vmem %s3, %s207
      %s209 = smul.u32 2, %s19
      %v211 = vld [vmem:[%s1] sm:$0xf]
      %v212 = vld [vmem:[%s198] sm:$0xff]
      %v213 = vld [vmem:[%s198 + $0x8] sm:$0xff]
      %v214 = vld [vmem:[%s198 + $0x10] sm:$0xff]
      %v215 = vld [vmem:[%s198 + $0x18] sm:$0xff]
      %v216 = vld [vmem:[%s198 + $0x20] sm:$0x33]
      %v217 = vld [vmem:[%s2] sm:$0xff]
      %219 = vset.pattern.permute.xlu0 0
      %220 = vperm.xlu0 %219, %v217
      %v221 = vpop.permute.xlu0 %220
      %v228 = vunpack.c.l.b16 %v212
      %v229 = vunpack.c.h.b16 %v212
      %v230 = vunpack.c.l.b16 %v213
      %v231 = vunpack.c.h.b16 %v213
      %v232 = vunpack.c.l.b16 %v214
      %v233 = vunpack.c.h.b16 %v214
      %v234 = vunpack.c.l.b16 %v215
      %v235 = vunpack.c.h.b16 %v215
      %v236 = vunpack.c.l.b16 %v216
      %v237 = vunpack.c.h.b16 %v216
      %v238 = vpack.c.b16 %v230, %v228
      %v239 = vpack.c.b16 %v231, %v229
      %v240 = vpack.c.b16 %v234, %v232
      %v241 = vpack.c.b16 %v235, %v233
      %v242 = vpack.c.b16 %v236, %v236
      %v243 = vpack.c.b16 %v237, %v237
      %vm248 = vcmask 293888
      %v250 = vsel %vm248, %v211, 0
      %vm252 = vcmask 1041408
      %v254 = vsel %vm252, %v242, 0
      %v257 = vsel %vm252, %v243, 0
      %259 = vmatprep.subr.bf16.mxu0 %v239
      %260 = vmatpush1.bf16.msra.mxu0 %v238
      %261 = vmatprep.subr.bf16.mxu0 %v241
      %262 = vmatpush1.bf16.msra.mxu0 %v240
      %263 = vmatprep.subr.bf16.mxu0 %v257
      %264 = vmatpush1.bf16.msra.mxu0 %v254
      %265 = vmatprep.subr.bf16.mxu0 0
      %266 = vmatpush1.bf16.msra.mxu0 0
      %267 = vmatprep.subr.bf16.mxu0 0
      %268 = vmatpush1.bf16.msra.mxu0 0
      %269 = vmatprep.subr.bf16.mxu0 0
      %270 = vmatpush1.bf16.msra.mxu0 0
      %271 = vmatprep.subr.bf16.mxu0 0
      %272 = vmatpush1.bf16.msra.mxu0 0
      %273 = vmatprep.subr.bf16.mxu0 0
      %274 = vmatpush1.bf16.msra.mxu0 0
      %275 = vmatprep.subr.bf16.mxu0 0
      %276 = vmatpush1.bf16.msra.mxu0 0
      %277 = vmatprep.subr.bf16.mxu0 0
      %278 = vmatpush1.bf16.msra.mxu0 0
      %279 = vmatprep.subr.bf16.mxu0 0
      %280 = vmatpush1.bf16.msra.mxu0 0
      %281 = vmatprep.subr.bf16.mxu0 0
      %282 = vmatpush1.bf16.msra.mxu0 0
      %283 = vmatprep.subr.bf16.mxu0 0
      %284 = vmatpush1.bf16.msra.mxu0 0
      %285 = vmatprep.subr.bf16.mxu0 0
      %286 = vmatpush1.bf16.msra.mxu0 0
      %287 = vmatprep.subr.bf16.mxu0 0
      %288 = vmatpush1.bf16.msra.mxu0 0
      %289 = vmatprep.subr.bf16.mxu0 0
      %290 = vmatpush1.bf16.msra.mxu0 0
      %291 = vmatprep.mubr.bf16.mxu0 0
      %292 = vmatmul.mubr.bf16.gmra.mrb[0].mxu0 %v250
      %v293 = vpop.f32.mrb[0].mxu0
      %v294 = vadd.f32 %v221, %v293
      %v295 = vpop.f32.mrb[0].mxu0
      %v296 = vadd.f32 %v221, %v295
      %v297 = vpop.f32.mrb[0].mxu0
      %v298 = vpop.f32.mrb[0].mxu0
      %299 = vdwg.mxu0
      %v300 = vmax.f32 %v294, 0.0
      %v301 = vmax.f32 %v296, 0.0
      %302 = vst [vmem:[%s208] sm:$0xff] %v300
      %303 = vst [vmem:[%s208 + $0x8] sm:$0xff] %v301
      %s304 = smul.u32 2, %s19
      %p305 = scmp.lt.s32.totalorder %s18, 1
      %s306 = scalar_select %p305, %s18, 1
      %p307 = scmp.lt.s32.totalorder %s304, 1
      %s308 = scalar_select %p307, %s304, 1
      %s309 = smul.addr %s306, 2
      %s310 = sadd.s32 %s308, %s309
      %s311 = smul.addr %s310, 8
      %s312 = scalar_lea.vmem %s3, %s311
      // Predicated region
      $region33: #{basic_conv.1} parent=31 // pred_check
        %p313 = pneg %p116
      $region34: #{basic_conv.1} parent=31 // pred_check_branch
        %315 = sbr.rel (%p313) target = $region36
      $region35: #{basic_conv.1} parent=31 // pred_region
        %s316 = smul.u32 2, %s19
      $region36: #{basic_conv.1} parent=31 // pred_fallthru
        _
    $region32: #{basic_conv.1} parent=5 // pred_fallthru
      _
    %p317 = scmp.le.s32.totalorder 2, %s9
    // Predicated region
    $region37: #{basic_conv.1} parent=5 // pred_check
      %p318 = pneg %p317
    $region38: #{basic_conv.1} parent=5 // pred_check_branch
      %320 = sbr.rel (%p318) target = $region40
    $region39: #{basic_conv.1} parent=5 // pred_region
      %s321 = ssub.s32 %s9, 2
      // Predicated region
      $region41: #{basic_conv.1} parent=39 // pred_check
        %p322 = pneg %p122
      $region42: #{basic_conv.1} parent=39 // pred_check_branch
        %324 = sbr.rel (%p322) target = $region44
      $region43: #{basic_conv.1} parent=39 // pred_region
        %s325 = smul.u32 2, %s21
        %p326 = scmp.lt.s32.totalorder %s20, 1
        %s327 = scalar_select %p326, %s20, 1
        %p328 = scmp.lt.s32.totalorder %s325, 1
        %s329 = scalar_select %p328, %s325, 1
        %s330 = smul.addr %s327, 2
        %s331 = sadd.s32 %s329, %s330
        %s332 = smul.addr %s331, 8
        %s333 = scalar_lea.vmem %s3, %s332
      $region44: #{basic_conv.1} parent=39 // pred_fallthru
        _
    $region40: #{basic_conv.1} parent=5 // pred_fallthru
      _
  $region6: #{basic_conv.1} parent=0 // loop_footer
    %s13 = sadd.s32 1, %s9
  $region7: #{basic_conv.1} parent=0 // loop_footer_branch
    %8 = sbr.rel target = $region3
  $region8: #{basic_conv.1} parent=0 // loop_exit
    _

</llo_original>
